<compile_context>
chip_gen: v7x
topology: tpu7x:2x2x1
jax: 0.10.0
libtpu: 0.0.40
codegen_flags: <defaults>
</compile_context>

<pallas_src>
import math

import jax
import jax.numpy as jnp
from jax.experimental import pallas as pl
from jax.experimental.pallas import tpu as pltpu


# ----------------------------------------------------------------------------
# In-kernel exact GELU (erf via Abramowitz-Stegun 7.1.26, f32 elementwise)
# ----------------------------------------------------------------------------
_A1 = 0.254829592
_A2 = -0.284496736
_A3 = 1.421413741
_A4 = -1.453152027
_A5 = 1.061405429
_P = 0.3275911
_INV_SQRT2 = 0.7071067811865476


def _erf(x):
    sign = jnp.where(x >= 0.0, 1.0, -1.0)
    a = jnp.abs(x)
    t = 1.0 / (1.0 + _P * a)
    poly = ((((_A5 * t + _A4) * t + _A3) * t + _A2) * t + _A1) * t
    return sign * (1.0 - poly * jnp.exp(-a * a))


def _gelu_exact(x):
    # torch.nn.functional.gelu default: 0.5 * x * (1 + erf(x / sqrt(2)))
    return 0.5 * x * (1.0 + _erf(x * _INV_SQRT2))


# ----------------------------------------------------------------------------
# Fused FFN kernel: one row tile per grid step
# ----------------------------------------------------------------------------
def _ffn_kernel(x_ref, w1_ref, b1_ref, w2_ref, b2_ref, o_ref):
    # x tile in f32; cast to bf16 only for the MXU operands.
    x = x_ref[...]                                               # (tm, dim) f32

    h = jnp.dot(x.astype(jnp.bfloat16), w1_ref[...],             # bf16 x bf16
                preferred_element_type=jnp.float32)              # f32 accumulate
    h = h + b1_ref[...]                                          # (tm, f_dim) f32
    h = _gelu_exact(h)                                           # f32 elementwise
    # TODO(synk): torch.nn.Dropout(0.1) is treated as identity (eval semantics).

    y = jnp.dot(h.astype(jnp.bfloat16), w2_ref[...],
                preferred_element_type=jnp.float32)
    o_ref[...] = y + b2_ref[...]                                 # (tm, dim) f32


def _pick_row_tile(rows):
    # Prefer large, 128-multiple row tiles; fall back to the full row extent
    # (always a legal block since it equals the array dim).
    for tile in (512, 256, 128):
        if rows % tile == 0:
            return tile
    return rows


def feed_forward(x, params):
    """x: (..., dim) float32 -> (..., dim) float32."""
    orig_shape = x.shape
    dim = orig_shape[-1]
    rows = 1
    for s in orig_shape[:-1]:
        rows *= s
    x2 = x.reshape(rows, dim)

    f_dim = params["w1"].shape[1]
    tm = _pick_row_tile(rows)
    grid = (rows // tm,)

    out = pl.pallas_call(
        _ffn_kernel,
        out_shape=jax.ShapeDtypeStruct((rows, dim), jnp.float32),
        grid=grid,
        in_specs=[
            pl.BlockSpec((tm, dim), lambda i: (i, 0)),      # x rows (tiled)
            pl.BlockSpec((dim, f_dim), lambda i: (0, 0)),   # W1 (grid-invariant)
            pl.BlockSpec((1, f_dim), lambda i: (0, 0)),     # b1
            pl.BlockSpec((f_dim, dim), lambda i: (0, 0)),   # W2 (grid-invariant)
            pl.BlockSpec((1, dim), lambda i: (0, 0)),       # b2
        ],
        out_specs=pl.BlockSpec((tm, dim), lambda i: (i, 0)),
        compiler_params=pltpu.CompilerParams(
            dimension_semantics=("parallel",),              # shard row tiles across TCs
        ),
    )(x2, params["w1"], params["b1"], params["w2"], params["b2"])
    # TODO(synk): for very large f_dim (v7x 64 MiB VMEM) add a K-tiled reduction
    # grid axis over f_dim instead of holding full W1/W2 blocks.
    return out.reshape(orig_shape)


# ----------------------------------------------------------------------------
# Parameter init (torch.nn.Linear-style uniform), weights stored as bf16
# ----------------------------------------------------------------------------
def init_params(key, dim, f_dim):
    k1, k2, k3, k4 = jax.random.split(key, 4)
    bound1 = 1.0 / math.sqrt(dim)
    bound2 = 1.0 / math.sqrt(f_dim)
    w1 = jax.random.uniform(k1, (dim, f_dim), jnp.float32, -bound1, bound1)
    b1 = jax.random.uniform(k2, (1, f_dim), jnp.float32, -bound1, bound1)
    w2 = jax.random.uniform(k3, (f_dim, dim), jnp.float32, -bound2, bound2)
    b2 = jax.random.uniform(k4, (1, dim), jnp.float32, -bound2, bound2)
    return {
        "w1": w1.astype(jnp.bfloat16), "b1": b1,   # weights bf16 (MXU-native)
        "w2": w2.astype(jnp.bfloat16), "b2": b2,   # biases stay f32
    }


def feed_forward_ref(x, params):
    """Pure-JAX f32 reference (same bf16-stored weights, exact erf GELU)."""
    w1 = params["w1"].astype(jnp.float32)
    w2 = params["w2"].astype(jnp.float32)
    h = x @ w1 + params["b1"][0]
    h = jax.nn.gelu(h, approximate=False)
    return h @ w2 + params["b2"][0]


if __name__ == "__main__":
    B, T, DIM, F_DIM = 2, 8, 32, 64

    key = jax.random.PRNGKey(0)
    kx, kp = jax.random.split(key)
    params = init_params(kp, DIM, F_DIM)
    x = jax.random.normal(kx, (B, T, DIM), jnp.float32)

    y = feed_forward(x, params)
    y = jax.block_until_ready(y)
    assert y.shape == (B, T, DIM)

    y_ref = feed_forward_ref(x, params)
    max_err = float(jnp.max(jnp.abs(y - y_ref)))
    # bf16 MXU operands with f32 accumulation: small, bounded drift vs f32 ref.
    assert jnp.allclose(y, y_ref, atol=3e-2, rtol=3e-2), max_err

    print("KERNEL_OK")
</pallas_src>

<mosaic_0001>
module attributes {stable_mosaic.version = 11 : i64} {
  func.func @_ffn_kernel(%arg0: i32, %arg1: memref<16x32xf32, #tpu.memory_space<vmem>>, %arg2: memref<32x64xbf16, #tpu.memory_space<vmem>>, %arg3: memref<1x64xf32, #tpu.memory_space<vmem>>, %arg4: memref<64x32xbf16, #tpu.memory_space<vmem>>, %arg5: memref<1x32xf32, #tpu.memory_space<vmem>>, %arg6: memref<16x32xf32, #tpu.memory_space<vmem>>) attributes {dimension_semantics = [#tpu.dimension_semantics<parallel>], iteration_bounds = array<i64: 1>, scalar_prefetch = 0 : i64, scratch_operands = 0 : i64, tpu.core_type = #tpu.core_type<tc>, window_params = [{transform_indices = @transform_0, window_bounds = array<i64: 16, 32>}, {pipeline_mode = #tpu.pipeline_mode<synchronous>, transform_indices = @transform_1, window_bounds = array<i64: 32, 64>}, {pipeline_mode = #tpu.pipeline_mode<synchronous>, transform_indices = @transform_2, window_bounds = array<i64: 1, 64>}, {pipeline_mode = #tpu.pipeline_mode<synchronous>, transform_indices = @transform_3, window_bounds = array<i64: 64, 32>}, {pipeline_mode = #tpu.pipeline_mode<synchronous>, transform_indices = @transform_4, window_bounds = array<i64: 1, 32>}, {transform_indices = @transform_5, window_bounds = array<i64: 16, 32>}]} {
    %c0 = arith.constant 0 : index
    %c0_0 = arith.constant 0 : index
    %0 = vector.load %arg1[%c0, %c0_0] : memref<16x32xf32, #tpu.memory_space<vmem>>, vector<16x32xf32>
    %1 = arith.truncf %0 : vector<16x32xf32> to vector<16x32xbf16>
    %c0_1 = arith.constant 0 : index
    %c0_2 = arith.constant 0 : index
    %2 = vector.load %arg2[%c0_1, %c0_2] : memref<32x64xbf16, #tpu.memory_space<vmem>>, vector<32x64xbf16>
    %cst = arith.constant dense<0.000000e+00> : vector<16x64xf32>
    %3 = tpu.matmul %1, %2, %cst {dimension_numbers = #tpu.dot_dimension_numbers<[1], [0], [0], [1], [0, 0, 1, 1], [], []>} : vector<16x32xbf16>, vector<32x64xbf16>, vector<16x64xf32> -> vector<16x64xf32>
    %c0_3 = arith.constant 0 : index
    %c0_4 = arith.constant 0 : index
    %4 = vector.load %arg3[%c0_3, %c0_4] : memref<1x64xf32, #tpu.memory_space<vmem>>, vector<1x64xf32>
    %5 = vector.broadcast %4 : vector<1x64xf32> to vector<16x64xf32>
    %6 = arith.addf %3, %5 : vector<16x64xf32>
    %cst_5 = arith.constant 5.000000e-01 : f32
    %7 = vector.broadcast %cst_5 : f32 to vector<16x64xf32>
    %8 = arith.mulf %7, %6 : vector<16x64xf32>
    %cst_6 = arith.constant 0.707106769 : f32
    %9 = vector.broadcast %cst_6 : f32 to vector<16x64xf32>
    %10 = arith.mulf %6, %9 : vector<16x64xf32>
    %cst_7 = arith.constant 0.000000e+00 : f32
    %11 = vector.broadcast %cst_7 : f32 to vector<16x64xf32>
    %12 = arith.cmpf oge, %10, %11 : vector<16x64xf32>
    %cst_8 = arith.constant 1.000000e+00 : f32
    %cst_9 = arith.constant -1.000000e+00 : f32
    %13 = vector.broadcast %cst_8 : f32 to vector<16x64xf32>
    %14 = vector.broadcast %cst_9 : f32 to vector<16x64xf32>
    %15 = arith.select %12, %13, %14 : vector<16x64xi1>, vector<16x64xf32>
    %16 = math.absf %10 : vector<16x64xf32>
    %cst_10 = arith.constant 0.327591091 : f32
    %17 = vector.broadcast %cst_10 : f32 to vector<16x64xf32>
    %18 = arith.mulf %17, %16 : vector<16x64xf32>
    %cst_11 = arith.constant 1.000000e+00 : f32
    %19 = vector.broadcast %cst_11 : f32 to vector<16x64xf32>
    %20 = arith.addf %19, %18 : vector<16x64xf32>
    %cst_12 = arith.constant 1.000000e+00 : f32
    %21 = vector.broadcast %cst_12 : f32 to vector<16x64xf32>
    %22 = arith.divf %21, %20 : vector<16x64xf32>
    %cst_13 = arith.constant 1.06140542 : f32
    %23 = vector.broadcast %cst_13 : f32 to vector<16x64xf32>
    %24 = arith.mulf %23, %22 : vector<16x64xf32>
    %cst_14 = arith.constant -1.45315206 : f32
    %25 = vector.broadcast %cst_14 : f32 to vector<16x64xf32>
    %26 = arith.addf %24, %25 : vector<16x64xf32>
    %27 = arith.mulf %26, %22 : vector<16x64xf32>
    %cst_15 = arith.constant 1.42141378 : f32
    %28 = vector.broadcast %cst_15 : f32 to vector<16x64xf32>
    %29 = arith.addf %27, %28 : vector<16x64xf32>
    %30 = arith.mulf %29, %22 : vector<16x64xf32>
    %cst_16 = arith.constant -0.284496725 : f32
    %31 = vector.broadcast %cst_16 : f32 to vector<16x64xf32>
    %32 = arith.addf %30, %31 : vector<16x64xf32>
    %33 = arith.mulf %32, %22 : vector<16x64xf32>
    %cst_17 = arith.constant 0.254829586 : f32
    %34 = vector.broadcast %cst_17 : f32 to vector<16x64xf32>
    %35 = arith.addf %33, %34 : vector<16x64xf32>
    %36 = arith.mulf %35, %22 : vector<16x64xf32>
    %cst_18 = arith.constant 0.000000e+00 : f32
    %37 = vector.broadcast %cst_18 : f32 to vector<16x64xf32>
    %38 = arith.subf %37, %16 : vector<16x64xf32>
    %39 = arith.mulf %38, %16 : vector<16x64xf32>
    %40 = math.exp %39 : vector<16x64xf32>
    %41 = arith.mulf %36, %40 : vector<16x64xf32>
    %cst_19 = arith.constant 1.000000e+00 : f32
    %42 = vector.broadcast %cst_19 : f32 to vector<16x64xf32>
    %43 = arith.subf %42, %41 : vector<16x64xf32>
    %44 = arith.mulf %15, %43 : vector<16x64xf32>
    %cst_20 = arith.constant 1.000000e+00 : f32
    %45 = vector.broadcast %cst_20 : f32 to vector<16x64xf32>
    %46 = arith.addf %45, %44 : vector<16x64xf32>
    %47 = arith.mulf %8, %46 : vector<16x64xf32>
    %48 = arith.truncf %47 : vector<16x64xf32> to vector<16x64xbf16>
    %c0_21 = arith.constant 0 : index
    %c0_22 = arith.constant 0 : index
    %49 = vector.load %arg4[%c0_21, %c0_22] : memref<64x32xbf16, #tpu.memory_space<vmem>>, vector<64x32xbf16>
    %cst_23 = arith.constant dense<0.000000e+00> : vector<16x32xf32>
    %50 = tpu.matmul %48, %49, %cst_23 {dimension_numbers = #tpu.dot_dimension_numbers<[1], [0], [0], [1], [0, 0, 1, 1], [], []>} : vector<16x64xbf16>, vector<64x32xbf16>, vector<16x32xf32> -> vector<16x32xf32>
    %c0_24 = arith.constant 0 : index
    %c0_25 = arith.constant 0 : index
    %51 = vector.load %arg5[%c0_24, %c0_25] : memref<1x32xf32, #tpu.memory_space<vmem>>, vector<1x32xf32>
    %52 = vector.broadcast %51 : vector<1x32xf32> to vector<16x32xf32>
    %53 = arith.addf %50, %52 : vector<16x32xf32>
    %c0_26 = arith.constant 0 : index
    %c0_27 = arith.constant 0 : index
    %54 = vector.load %arg6[%c0_26, %c0_27] : memref<16x32xf32, #tpu.memory_space<vmem>>, vector<16x32xf32>
    tpu.vector_store %arg6[%c0_26, %c0_27], %53 {strides = array<i32>} : memref<16x32xf32, #tpu.memory_space<vmem>>, vector<16x32xf32>,
    return
  }
  func.func @transform_0(%arg0: i32) -> (i32, i32) {
    %c0_i32 = arith.constant 0 : i32
    %c0_i32_0 = arith.constant 0 : i32
    return %arg0, %c0_i32 : i32, i32
  }
  func.func @transform_1(%arg0: i32) -> (i32, i32) {
    %c0_i32 = arith.constant 0 : i32
    %c0_i32_0 = arith.constant 0 : i32
    %c0_i32_1 = arith.constant 0 : i32
    return %c0_i32, %c0_i32_0 : i32, i32
  }
  func.func @transform_2(%arg0: i32) -> (i32, i32) {
    %c0_i32 = arith.constant 0 : i32
    %c0_i32_0 = arith.constant 0 : i32
    %c0_i32_1 = arith.constant 0 : i32
    return %c0_i32, %c0_i32_0 : i32, i32
  }
  func.func @transform_3(%arg0: i32) -> (i32, i32) {
    %c0_i32 = arith.constant 0 : i32
    %c0_i32_0 = arith.constant 0 : i32
    %c0_i32_1 = arith.constant 0 : i32
    return %c0_i32, %c0_i32_0 : i32, i32
  }
  func.func @transform_4(%arg0: i32) -> (i32, i32) {
    %c0_i32 = arith.constant 0 : i32
    %c0_i32_0 = arith.constant 0 : i32
    %c0_i32_1 = arith.constant 0 : i32
    return %c0_i32, %c0_i32_0 : i32, i32
  }
  func.func @transform_5(%arg0: i32) -> (i32, i32) {
    %c0_i32 = arith.constant 0 : i32
    %c0_i32_0 = arith.constant 0 : i32
    return %arg0, %c0_i32 : i32, i32
  }
}

</mosaic_0001>

<llo_original>
// kernel: tpu_custom_call.1
$region0: #{tpu_custom_call.1}
  #allocation0 [shape = 'u32[]', space=smem, size = 0x4, offset = 0x4, fixed_abs, tag = 'smem constant byte address 0x4 - core index']
  #allocation1 [shape = 'u32[144,128]{1,0:T(1,128)}', space=vmem, size = 0x12000, scoped, tag = 'internal scratch']
  %s0 = inlined_call_operand.vmem [shape: f32[16,32], index: 0, kind: input, shape index: {}]
  %s1 = inlined_call_operand.vmem [shape: bf16[32,64], index: 1, kind: input, shape index: {}]
  %s2 = inlined_call_operand.vmem [shape: f32[1,64], index: 2, kind: input, shape index: {}]
  %s3 = inlined_call_operand.vmem [shape: bf16[64,32], index: 3, kind: input, shape index: {}]
  %s4 = inlined_call_operand.vmem [shape: f32[1,32], index: 4, kind: input, shape index: {}]
  %s5 = inlined_call_operand.hbm [shape: f32[16,32], index: 5, kind: output, shape index: {}]
  %s6 = sld [smem:[#allocation0]]
  $region30: #{tpu_custom_call.1} parent=0
    _
  %s8 = ssub.s32 1, %s6
  %s9 = scalar_select 0, %s8, %s6
  $region1: #{tpu_custom_call.1} parent=0
    #allocation2 [shape = 'u8[8192]{0}', space=vmem, size = 0x2000, scoped, tag = 'output window, operand 0, single buffered']
    #allocation3 [shape = 's32[1]{0}', space=sflag, size = 0x4, scoped, tag = 'scoped memory for tpu_custom_call.1']
    %10 = vsyncpa [#allocation3], 0
    // Predicated region
    $region2: #{tpu_custom_call.1} parent=1 // pred_check
      _
    $region3: #{tpu_custom_call.1} parent=1 // pred_check_branch
      %12 = sbr.rel (0) target = $region5
    $region4: #{tpu_custom_call.1} parent=1 // pred_region
      _
    $region5: #{tpu_custom_call.1} parent=1 // pred_fallthru
      _
    // Predicated region
    $region6: #{tpu_custom_call.1} parent=1 // pred_check
      _
    $region7: #{tpu_custom_call.1} parent=1 // pred_check_branch
      %14 = sbr.rel (0) target = $region9
    $region8: #{tpu_custom_call.1} parent=1 // pred_region
      _
    $region9: #{tpu_custom_call.1} parent=1 // pred_fallthru
      _
    // Predicated region
    $region10: #{tpu_custom_call.1} parent=1 // pred_check
      _
    $region11: #{tpu_custom_call.1} parent=1 // pred_check_branch
      %16 = sbr.rel (0) target = $region13
    $region12: #{tpu_custom_call.1} parent=1 // pred_region
      _
    $region13: #{tpu_custom_call.1} parent=1 // pred_fallthru
      _
    // Predicated region
    $region14: #{tpu_custom_call.1} parent=1 // pred_check
      _
    $region15: #{tpu_custom_call.1} parent=1 // pred_check_branch
      %18 = sbr.rel (0) target = $region17
    $region16: #{tpu_custom_call.1} parent=1 // pred_region
      _
    $region17: #{tpu_custom_call.1} parent=1 // pred_fallthru
      _
    // Predicated region
    $region18: #{tpu_custom_call.1} parent=1 // pred_check
      _
    $region19: #{tpu_custom_call.1} parent=1 // pred_check_branch
      %20 = sbr.rel (0) target = $region21
    $region20: #{tpu_custom_call.1} parent=1 // pred_region
      _
    $region21: #{tpu_custom_call.1} parent=1 // pred_fallthru
      _
    %v22 = vld [vmem:[%s0] sm:$0xff]
    %v23 = vld [vmem:[%s0 + $0x8] sm:$0xff]
    %v24 = vpack.c.bf16 %v23, %v22
    %v25 = vld [vmem:[%s1] sm:$0xf]
    %v26 = vld [vmem:[%s1 + $0x4] sm:$0xf]
    %v27 = vld [vmem:[%s1 + $0x8] sm:$0xf]
    %v28 = vld [vmem:[%s1 + $0xc] sm:$0xf]
    %v29 = vld [vmem:[%s2] sm:$0x1]
    %v31 = vlaneseq
    %v32 = vshrl.u32 %v31, 7
    %v33 = vsub.s32 0, %v32
    %v34 = vrot.slane %v29, %v33
    %v40 = vunpack.c.l.b16 %v25
    %v41 = vunpack.c.l.b16 %v26
    %v42 = vunpack.c.l.b16 %v27
    %v43 = vunpack.c.l.b16 %v28
    %v44 = vpack.c.b16 %v41, %v40
    %v45 = vpack.c.b16 %v43, %v42
    %vm48 = vcmask 261120
    %v50 = vsel %vm48, %v24, 0
    %52 = vmatprep.subr.bf16.mxu0 0
    %53 = vmatpush1.bf16.msra.mxu0 %v44
    %54 = vmatprep.subr.bf16.mxu0 0
    %55 = vmatpush1.bf16.msra.mxu0 %v45
    %56 = vmatprep.subr.bf16.mxu0 0
    %57 = vmatpush1.bf16.msra.mxu0 0
    %58 = vmatprep.subr.bf16.mxu0 0
    %59 = vmatpush1.bf16.msra.mxu0 0
    %60 = vmatprep.subr.bf16.mxu0 0
    %61 = vmatpush1.bf16.msra.mxu0 0
    %62 = vmatprep.subr.bf16.mxu0 0
    %63 = vmatpush1.bf16.msra.mxu0 0
    %64 = vmatprep.subr.bf16.mxu0 0
    %65 = vmatpush1.bf16.msra.mxu0 0
    %66 = vmatprep.subr.bf16.mxu0 0
    %67 = vmatpush1.bf16.msra.mxu0 0
    %68 = vmatprep.subr.bf16.mxu0 0
    %69 = vmatpush1.bf16.msra.mxu0 0
    %70 = vmatprep.subr.bf16.mxu0 0
    %71 = vmatpush1.bf16.msra.mxu0 0
    %72 = vmatprep.subr.bf16.mxu0 0
    %73 = vmatpush1.bf16.msra.mxu0 0
    %74 = vmatprep.subr.bf16.mxu0 0
    %75 = vmatpush1.bf16.msra.mxu0 0
    %76 = vmatprep.subr.bf16.mxu0 0
    %77 = vmatpush1.bf16.msra.mxu0 0
    %78 = vmatprep.subr.bf16.mxu0 0
    %79 = vmatpush1.bf16.msra.mxu0 0
    %80 = vmatprep.subr.bf16.mxu0 0
    %81 = vmatpush1.bf16.msra.mxu0 0
    %82 = vmatprep.subr.bf16.mxu0 0
    %83 = vmatpush1.bf16.msra.mxu0 0
    %84 = vmatprep.mubr.bf16.mxu0 0
    %85 = vmatmul.mubr.bf16.gmra.mrb[0].mxu0 %v50
    %v86 = vpop.f32.mrb[0].mxu0
    %v87 = vadd.f32 %v34, %v86
    %v88 = vpop.f32.mrb[0].mxu0
    %v89 = vpop.f32.mrb[0].mxu0
    %v90 = vadd.f32 %v34, %v89
    %v91 = vpop.f32.mrb[0].mxu0
    %92 = vdwg.mxu0
    %v93 = vmul.f32 %v87, 0.5
    %v94 = vmul.f32 %v90, 0.5
    %v95 = vmul.f32 %v87, 0.70710677
    %v96 = vmul.f32 %v90, 0.70710677
    %vm97 = vcmp.ge.f32.partialorder %v95, 0.0
    %vm98 = vcmp.ge.f32.partialorder %v96, 0.0
    %v99 = vsel %vm97, 1.0, -1.0
    %v100 = vsel %vm98, 1.0, -1.0
    %v101 = vand.u32 2147483647, %v95
    %v102 = vand.u32 2147483647, %v96
    %v103 = vmul.f32 %v101, 0.3275911
    %v104 = vmul.f32 %v102, 0.3275911
    %v105 = vadd.f32 %v103, 1.0
    %v106 = vadd.f32 %v104, 1.0
    %v107 = vrcp.pop %v105
    %v108 = vmul.f32 1.0, %v107
    %v109 = vrcp.pop %v106
    %v110 = vmul.f32 1.0, %v109
    %v111 = vmul.f32 %v108, 1.0614054
    %v112 = vmul.f32 %v110, 1.0614054
    %v113 = vadd.f32 %v111, -1.4531521
    %v114 = vadd.f32 %v112, -1.4531521
    %v115 = vmul.f32 %v113, %v108
    %v116 = vmul.f32 %v114, %v110
    %v117 = vadd.f32 %v115, 1.4214138
    %v118 = vadd.f32 %v116, 1.4214138
    %v119 = vmul.f32 %v117, %v108
    %v120 = vmul.f32 %v118, %v110
    %v121 = vadd.f32 %v119, -0.28449672
    %v122 = vadd.f32 %v120, -0.28449672
    %v123 = vmul.f32 %v121, %v108
    %v124 = vmul.f32 %v122, %v110
    %v125 = vadd.f32 %v123, 0.2548296
    %v126 = vadd.f32 %v124, 0.2548296
    %v127 = vmul.f32 %v125, %v108
    %v128 = vmul.f32 %v126, %v110
    %v129 = vsub.f32 0.0, %v101
    %v130 = vsub.f32 0.0, %v102
    %v131 = vmul.f32 %v129, %v101
    %v132 = vmul.f32 %v130, %v102
    %v133 = vmul.f32 %v131, 1.442695
    %v134 = vpow.pop %v133
    %v135 = vmul.f32 %v132, 1.442695
    %v136 = vpow.pop %v135
    %v137 = vmul.f32 %v127, %v134
    %v138 = vmul.f32 %v128, %v136
    %v139 = vsub.f32 1.0, %v137
    %v140 = vsub.f32 1.0, %v138
    %v141 = vmul.f32 %v99, %v139
    %v142 = vmul.f32 %v100, %v140
    %v143 = vadd.f32 %v141, 1.0
    %v144 = vadd.f32 %v142, 1.0
    %v145 = vmul.f32 %v93, %v143
    %v146 = vmul.f32 %v94, %v144
    %v147 = vpack.c.bf16 %v146, %v145
    %v148 = vld [vmem:[%s3] sm:$0xf]
    %v149 = vld [vmem:[%s3 + $0x4] sm:$0xf]
    %v150 = vld [vmem:[%s3 + $0x8] sm:$0xf]
    %v151 = vld [vmem:[%s3 + $0xc] sm:$0xf]
    %v152 = vld [vmem:[%s3 + $0x10] sm:$0xf]
    %v153 = vld [vmem:[%s3 + $0x14] sm:$0xf]
    %v154 = vld [vmem:[%s3 + $0x18] sm:$0xf]
    %v155 = vld [vmem:[%s3 + $0x1c] sm:$0xf]
    %v156 = vld [vmem:[%s4] sm:$0x1]
    %v158 = vlaneseq
    %v159 = vshrl.u32 %v158, 7
    %v160 = vsub.s32 0, %v159
    %v161 = vrot.slane %v156, %v160
    %v171 = vunpack.c.l.b16 %v148
    %v172 = vunpack.c.l.b16 %v149
    %v173 = vunpack.c.l.b16 %v150
    %v174 = vunpack.c.l.b16 %v151
    %v175 = vunpack.c.l.b16 %v152
    %v176 = vunpack.c.l.b16 %v153
    %v177 = vunpack.c.l.b16 %v154
    %v178 = vunpack.c.l.b16 %v155
    %v179 = vpack.c.b16 %v172, %v171
    %v180 = vpack.c.b16 %v174, %v173
    %v181 = vpack.c.b16 %v176, %v175
    %v182 = vpack.c.b16 %v178, %v177
    %vm187 = vcmask 523264
    %v189 = vsel %vm187, %v147, 0
    %191 = vmatprep.subr.bf16.mxu0 0
    %192 = vmatpush1.bf16.msra.mxu0 %v179
    %193 = vmatprep.subr.bf16.mxu0 0
    %194 = vmatpush1.bf16.msra.mxu0 %v180
    %195 = vmatprep.subr.bf16.mxu0 0
    %196 = vmatpush1.bf16.msra.mxu0 %v181
    %197 = vmatprep.subr.bf16.mxu0 0
    %198 = vmatpush1.bf16.msra.mxu0 %v182
    %199 = vmatprep.subr.bf16.mxu0 0
    %200 = vmatpush1.bf16.msra.mxu0 0
    %201 = vmatprep.subr.bf16.mxu0 0
    %202 = vmatpush1.bf16.msra.mxu0 0
    %203 = vmatprep.subr.bf16.mxu0 0
    %204 = vmatpush1.bf16.msra.mxu0 0
    %205 = vmatprep.subr.bf16.mxu0 0
    %206 = vmatpush1.bf16.msra.mxu0 0
    %207 = vmatprep.subr.bf16.mxu0 0
    %208 = vmatpush1.bf16.msra.mxu0 0
    %209 = vmatprep.subr.bf16.mxu0 0
    %210 = vmatpush1.bf16.msra.mxu0 0
    %211 = vmatprep.subr.bf16.mxu0 0
    %212 = vmatpush1.bf16.msra.mxu0 0
    %213 = vmatprep.subr.bf16.mxu0 0
    %214 = vmatpush1.bf16.msra.mxu0 0
    %215 = vmatprep.subr.bf16.mxu0 0
    %216 = vmatpush1.bf16.msra.mxu0 0
    %217 = vmatprep.subr.bf16.mxu0 0
    %218 = vmatpush1.bf16.msra.mxu0 0
    %219 = vmatprep.subr.bf16.mxu0 0
    %220 = vmatpush1.bf16.msra.mxu0 0
    %221 = vmatprep.subr.bf16.mxu0 0
    %222 = vmatpush1.bf16.msra.mxu0 0
    %223 = vmatprep.mubr.bf16.mxu0 0
    %224 = vmatmul.mubr.bf16.gmra.mrb[0].mxu0 %v189
    %v225 = vpop.f32.mrb[0].mxu0
    %v226 = vadd.f32 %v161, %v225
    %v227 = vpop.f32.mrb[0].mxu0
    %v228 = vpop.f32.mrb[0].mxu0
    %v229 = vadd.f32 %v161, %v228
    %v230 = vpop.f32.mrb[0].mxu0
    %231 = vdwg.mxu0
    %232 = vst.msk [vmem:[#allocation2] sm:$0xff] %vm48, %v226
    %233 = vst.msk [vmem:[#allocation2 + $0x8] sm:$0xff] %vm48, %v229
    // Predicated region
    $region22: #{tpu_custom_call.1} parent=1 // pred_check
      _
    $region23: #{tpu_custom_call.1} parent=1 // pred_check_branch
      %235 = sbr.rel (0) target = $region25
    $region24: #{tpu_custom_call.1} parent=1 // pred_region
      %s237 = ssub.s32 256, 256
      %238 = vsyncadd [#allocation3], %s237
      %s239 = sshll.u32 [#allocation2], 4
      %s240 = int_to_ptr.vmem [resolvable:$true] %s239
      %245 = dma.vmem_to_hbm [thread:$0]  %s240, 256, %s5, [#allocation3], 128, 128, 8
    $region25: #{tpu_custom_call.1} parent=1 // pred_fallthru
      _
    // Predicated region
    $region26: #{tpu_custom_call.1} parent=1 // pred_check
      _
    $region27: #{tpu_custom_call.1} parent=1 // pred_check_branch
      %247 = sbr.rel (0) target = $region29
    $region28: #{tpu_custom_call.1} parent=1 // pred_region
      %248 = dma.done [#allocation3], 256
    $region29: #{tpu_custom_call.1} parent=1 // pred_fallthru
      _
    %249 = vsyncpa [#allocation3], 1

</llo_original>
